<compile_context>
chip_gen: v7x
topology: tpu7x:2x2x1
jax: 0.10.0
libtpu: 0.0.40
codegen_flags: <defaults>
</compile_context>

<pallas_src>
import functools

import jax
import jax.numpy as jnp
from jax.experimental import pallas as pl
from jax.experimental.pallas import tpu as pltpu


_IO_BLOCK_TARGET = 1 << 20      # ~1 MiB of in+out HBM traffic per grid step
_MAX_BLOCK_ROWS = 1024          # cap on rows per grid step
_TARGET_GRID_STEPS = 4          # >= 2 blocks per TensorCore on dual-core (v7x) parts
_PAIRWISE_MAX_L = 64            # transposed pairwise path for L <= 64, bisection above
_BISECT_ITERS = 30              # tau bracket ~2^-30 wide before the exact refine step


def _budgets():
    """Generation-aware VMEM sizing (v5e/v6e: 128 MiB VMEM, v7x: 64 MiB)."""
    cap = 64 << 20                                   # conservative default (v7x)
    try:
        info = pltpu.get_tpu_info()
        cap = int(getattr(info, "vmem_capacity_bytes", cap)) or cap
    except Exception:
        pass
    temp_budget = min(32 << 20, max(8 << 20, cap // 4))
    vmem_limit = min(96 << 20, max(32 << 20, (cap * 3) // 4))
    return temp_budget, vmem_limit


def _choose_rows(R, row_io_bytes, row_temp_bytes, temp_budget, lane_floor):
    """Rows of the (R, L) view processed per grid step."""
    if R <= 8:
        return R                                     # single block == full array dims
    if R <= lane_floor:
        # Keep (almost) all rows in one block so the transposed compute uses as many
        # of the 128 lanes as the problem allows; 8-align the block so the in-kernel
        # transpose stays sublane-aligned (ragged tail handled by the cdiv grid).
        return R if R % 8 == 0 else (R // 8) * 8
    by_temp = temp_budget // max(1, row_temp_bytes)
    by_io = _IO_BLOCK_TARGET // max(1, row_io_bytes)
    rb = max(lane_floor, min(by_temp, by_io, _MAX_BLOCK_ROWS))
    # Aim for >= _TARGET_GRID_STEPS blocks (2 per TensorCore on v7x) unless that
    # would shrink the block below the lane-density floor (density wins).
    rb = min(rb, max(lane_floor, R // _TARGET_GRID_STEPS))
    rb = max(8, (rb // 8) * 8)
    return min(rb, (R // 8) * 8)


def _make_pairwise_kernel(L):
    """Sort-free pairwise sparsemax with rows on the 128-lane axis (small L)."""
    ci = L if L <= 16 else 8                  # chunk of the summed i axis (<= 8 chunks)
    n_chunks = (L + ci - 1) // ci

    def kernel(x_ref, o_ref):
        # x_ref / o_ref: (rb, L).  Transpose once so every pairwise temporary is
        # laid out (i, j, rows): rows dense on lanes, the summed i axis leading
        # (its reduction is plain VPU adds, not XLU lane reductions).
        z = x_ref[...].astype(jnp.float32)            # (rb, L)
        zt = z.T                                      # (L, rb): L sublanes, rows lanes
        zt = zt - jnp.max(zt, axis=0, keepdims=True)  # per-row shift (matches torch)

        zj = zt[None, :, :]                           # (1, L, rb) candidates j
        # ge / sg are exact as f32 for L <= 2^24 (review note).
        ge = jnp.zeros(zt.shape, jnp.float32)         # #{i : z_i >= z_j}
        sg = jnp.zeros(zt.shape, jnp.float32)         # sum_i z_i [z_i >= z_j]
        for c in range(n_chunks):                     # compile-time unrolled (<= 8)
            c0 = c * ci
            c1 = min(c0 + ci, L)
            zi = zt[c0:c1][:, None, :]                # (cw, 1, rb) static sublane slice
            m = (zi >= zj).astype(jnp.float32)        # (cw, L, rb); reused for both sums
            ge = ge + jnp.sum(m, axis=0)              # leading-axis sum -> VPU adds
            sg = sg + jnp.sum(m * zi, axis=0)         # zi finite -> no 0*inf hazard

        # Sorted condition 1 + r*zs_r > cumsum_r evaluated per element via its
        # descending rank (ties included) -- same math as the torch sort version.
        support = (1.0 + ge * zt > sg).astype(jnp.float32)    # (L, rb)
        k = jnp.max(support * ge, axis=0, keepdims=True)      # (1, rb)
        ssum = jnp.sum(support * zt, axis=0, keepdims=True)   # (1, rb)
        tau = (ssum - 1.0) / k                                # exact divide
        out_t = jnp.maximum(zt - tau, 0.0)                    # (L, rb)
        o_ref[...] = out_t.T.astype(o_ref.dtype)              # back to (rb, L)

    return kernel


def _make_bisect_kernel():
    """Bisection-on-tau sparsemax for long rows (L > _PAIRWISE_MAX_L):
    O(L * iters) elementwise work, no 3-D temporaries, exact refine at the end."""

    def kernel(x_ref, o_ref):
        z = x_ref[...].astype(jnp.float32)              # (rb, L)
        z = z - jnp.max(z, axis=-1, keepdims=True)      # max(z) == 0 per row
        # Root of f(tau) = sum_j max(z_j - tau, 0) - 1 lies in [-1, 0]:
        #   f(-1) >= max(z) + 1 - 1 = 0  (i.e. sum >= 1)   and   f(0) = -1 < 0.
        lo = jnp.full(z.shape[:-1] + (1,), -1.0, jnp.float32)
        hi = jnp.zeros_like(lo)
        for _ in range(_BISECT_ITERS):                  # compile-time unrolled
            mid = 0.5 * (lo + hi)
            f = jnp.sum(jnp.maximum(z - mid, 0.0), axis=-1, keepdims=True)
            pred = f >= 1.0
            lo = jnp.where(pred, mid, lo)
            hi = jnp.where(pred, hi, mid)
        mid = 0.5 * (lo + hi)                           # |mid - tau*| ~ 2^-31
        # Exact refine: the bracket pins the support set; recompute tau exactly as
        # in the sort formulation (boundary ties do not change tau).
        support = (z > mid).astype(jnp.float32)
        k = jnp.sum(support, axis=-1, keepdims=True)
        ssum = jnp.sum(support * z, axis=-1, keepdims=True)
        tau = (ssum - 1.0) / k                          # exact divide
        o_ref[...] = jnp.maximum(z - tau, 0.0).astype(o_ref.dtype)

    return kernel


@functools.partial(jax.jit, static_argnames=("dim",))
def sparsemax(x, dim=-1):
    """Pallas sparsemax matching the PyTorch module's forward semantics:
    sparsemax applied independently along axis `dim`."""
    ndim = x.ndim
    d = dim % ndim
    xm = jnp.moveaxis(x, d, ndim - 1)          # copy-free when dim == -1
    mshape = xm.shape
    L = mshape[-1]
    x2 = xm.reshape(-1, L)                     # (R, L); sparsemax over axis 1
    R = x2.shape[0]

    temp_budget, vmem_limit = _budgets()
    itemsize = jnp.dtype(x.dtype).itemsize
    if L <= _PAIRWISE_MAX_L:
        kernel = _make_pairwise_kernel(L)
        row_temp = 3 * L * L * 4               # pairwise f32 temporaries per row
        lane_floor = 128                       # rows sit on lanes after transpose
    else:
        kernel = _make_bisect_kernel()
        row_temp = 8 * L                       # a few (rb, L) f32 temporaries
        lane_floor = 8                         # L itself is the lane axis
    rb = _choose_rows(R, 2 * L * itemsize, row_temp, temp_budget, lane_floor)

    out = pl.pallas_call(
        kernel,
        out_shape=jax.ShapeDtypeStruct((R, L), x.dtype),
        grid_spec=pltpu.PrefetchScalarGridSpec(
            num_scalar_prefetch=0,
            grid=(pl.cdiv(R, rb),),            # ragged last block masked by Pallas
            in_specs=[pl.BlockSpec((rb, L), lambda i: (i, 0))],
            out_specs=pl.BlockSpec((rb, L), lambda i: (i, 0)),
        ),
        compiler_params=pltpu.CompilerParams(
            dimension_semantics=("parallel",),
            vmem_limit_bytes=vmem_limit,
        ),
    )(x2)

    out = out.reshape(mshape)                  # free
    return jnp.moveaxis(out, ndim - 1, d)      # free when dim == -1


def sparsemax_ref(x, dim=-1):
    """Pure-JAX reference mirroring the PyTorch sort/cumsum formulation."""
    z = jnp.moveaxis(x, dim, -1).astype(jnp.float32)
    L = z.shape[-1]
    z = z - jnp.max(z, axis=-1, keepdims=True)
    zs = -jnp.sort(-z, axis=-1)
    r = jnp.arange(1, L + 1, dtype=z.dtype)
    cum = jnp.cumsum(zs, axis=-1)
    is_gt = (1 + r * zs > cum).astype(z.dtype)
    k = jnp.max(is_gt * r, axis=-1, keepdims=True)
    taus = (jnp.sum(is_gt * zs, axis=-1, keepdims=True) - 1) / k
    out = jnp.maximum(z - taus, 0.0).astype(x.dtype)
    return jnp.moveaxis(out, -1, dim)


if __name__ == "__main__":
    key = jax.random.PRNGKey(0)
    k1, k2, k3 = jax.random.split(key, 3)

    # Module-default case (dim=None -> -1): batch=2, channels=4, spatial=16x16.
    x = jax.random.normal(k1, (2, 4, 16, 16), dtype=jnp.float32) * 3.0
    y = jax.block_until_ready(sparsemax(x, dim=-1))
    y_ref = sparsemax_ref(x, dim=-1)
    assert y.shape == x.shape and y.dtype == x.dtype
    assert jnp.allclose(y, y_ref, atol=1e-5, rtol=1e-5), "mismatch vs reference"
    assert jnp.allclose(jnp.sum(y, axis=-1), 1.0, atol=1e-5)

    # Ragged row count (R = 26 rows is not a multiple of the 8-row tiling).
    x_r = jax.random.normal(k2, (2, 13, 16), dtype=jnp.float32) * 3.0
    y_r = jax.block_until_ready(sparsemax(x_r, dim=-1))
    assert jnp.allclose(y_r, sparsemax_ref(x_r, dim=-1), atol=1e-5, rtol=1e-5)

    # Long sparsemax axis (L = 320) over dim=0 exercises the bisection path.
    x_l = jax.random.normal(k3, (320, 16), dtype=jnp.float32) * 3.0
    y_l = jax.block_until_ready(sparsemax(x_l, dim=0))
    assert jnp.allclose(y_l, sparsemax_ref(x_l, dim=0), atol=1e-5, rtol=1e-5)

    print("KERNEL_OK")
</pallas_src>

<mosaic_0001>
module attributes {stable_mosaic.version = 11 : i64} {
  func.func @kernel(%arg0: i32, %arg1: memref<128x16xf32, #tpu.memory_space<vmem>>, %arg2: memref<128x16xf32, #tpu.memory_space<vmem>>) attributes {dimension_semantics = [#tpu.dimension_semantics<parallel>], iteration_bounds = array<i64: 1>, scalar_prefetch = 0 : i64, scratch_operands = 0 : i64, tpu.core_type = #tpu.core_type<tc>, window_params = [{transform_indices = @transform_0, window_bounds = array<i64: 128, 16>}, {transform_indices = @transform_1, window_bounds = array<i64: 128, 16>}]} {
    %c0 = arith.constant 0 : index
    %c0_0 = arith.constant 0 : index
    %0 = vector.load %arg1[%c0, %c0_0] : memref<128x16xf32, #tpu.memory_space<vmem>>, vector<128x16xf32>
    %1 = tpu.transpose %0, [1, 0] : vector<128x16xf32> -> vector<16x128xf32>
    %cst = arith.constant dense<0xFF800000> : vector<128xf32>
    %2 = vector.multi_reduction <maximumf>, %1, %cst [0] : vector<16x128xf32> to vector<128xf32>
    %3 = vector.shape_cast %2 : vector<128xf32> to vector<1x128xf32>
    %4 = vector.broadcast %3 : vector<1x128xf32> to vector<16x128xf32>
    %5 = arith.subf %1, %4 : vector<16x128xf32>
    %6 = vector.shape_cast %5 : vector<16x128xf32> to vector<1x16x128xf32>
    %cst_1 = arith.constant 0.000000e+00 : f32
    %7 = vector.broadcast %cst_1 : f32 to vector<16x128xf32>
    %cst_2 = arith.constant 0.000000e+00 : f32
    %8 = vector.broadcast %cst_2 : f32 to vector<16x128xf32>
    %9 = vector.shape_cast %5 : vector<16x128xf32> to vector<16x1x128xf32>
    %10 = vector.broadcast %9 : vector<16x1x128xf32> to vector<16x16x128xf32>
    %11 = vector.broadcast %6 : vector<1x16x128xf32> to vector<16x16x128xf32>
    %12 = arith.cmpf oge, %10, %11 : vector<16x16x128xf32>
    %13 = arith.extui %12 : vector<16x16x128xi1> to vector<16x16x128xi32>
    %14 = arith.sitofp %13 : vector<16x16x128xi32> to vector<16x16x128xf32>
    %cst_3 = arith.constant dense<0.000000e+00> : vector<16x128xf32>
    %15 = vector.multi_reduction <add>, %14, %cst_3 [0] : vector<16x16x128xf32> to vector<16x128xf32>
    %16 = arith.addf %7, %15 : vector<16x128xf32>
    %17 = vector.broadcast %9 : vector<16x1x128xf32> to vector<16x16x128xf32>
    %18 = arith.mulf %14, %17 : vector<16x16x128xf32>
    %cst_4 = arith.constant dense<0.000000e+00> : vector<16x128xf32>
    %19 = vector.multi_reduction <add>, %18, %cst_4 [0] : vector<16x16x128xf32> to vector<16x128xf32>
    %20 = arith.addf %8, %19 : vector<16x128xf32>
    %21 = arith.mulf %16, %5 : vector<16x128xf32>
    %cst_5 = arith.constant 1.000000e+00 : f32
    %22 = vector.broadcast %cst_5 : f32 to vector<16x128xf32>
    %23 = arith.addf %22, %21 : vector<16x128xf32>
    %24 = arith.cmpf ogt, %23, %20 : vector<16x128xf32>
    %25 = arith.extui %24 : vector<16x128xi1> to vector<16x128xi32>
    %26 = arith.sitofp %25 : vector<16x128xi32> to vector<16x128xf32>
    %27 = arith.mulf %26, %16 : vector<16x128xf32>
    %cst_6 = arith.constant dense<0xFF800000> : vector<128xf32>
    %28 = vector.multi_reduction <maximumf>, %27, %cst_6 [0] : vector<16x128xf32> to vector<128xf32>
    %29 = vector.shape_cast %28 : vector<128xf32> to vector<1x128xf32>
    %30 = arith.mulf %26, %5 : vector<16x128xf32>
    %cst_7 = arith.constant dense<0.000000e+00> : vector<128xf32>
    %31 = vector.multi_reduction <add>, %30, %cst_7 [0] : vector<16x128xf32> to vector<128xf32>
    %32 = vector.shape_cast %31 : vector<128xf32> to vector<1x128xf32>
    %cst_8 = arith.constant 1.000000e+00 : f32
    %33 = vector.broadcast %cst_8 : f32 to vector<1x128xf32>
    %34 = arith.subf %32, %33 : vector<1x128xf32>
    %35 = arith.divf %34, %29 : vector<1x128xf32>
    %36 = vector.broadcast %35 : vector<1x128xf32> to vector<16x128xf32>
    %37 = arith.subf %5, %36 : vector<16x128xf32>
    %cst_9 = arith.constant 0.000000e+00 : f32
    %38 = vector.broadcast %cst_9 : f32 to vector<16x128xf32>
    %39 = arith.maximumf %37, %38 : vector<16x128xf32>
    %40 = tpu.transpose %39, [1, 0] : vector<16x128xf32> -> vector<128x16xf32>
    %c0_10 = arith.constant 0 : index
    %c0_11 = arith.constant 0 : index
    %41 = vector.load %arg2[%c0_10, %c0_11] : memref<128x16xf32, #tpu.memory_space<vmem>>, vector<128x16xf32>
    tpu.vector_store %arg2[%c0_10, %c0_11], %40 {strides = array<i32>} : memref<128x16xf32, #tpu.memory_space<vmem>>, vector<128x16xf32>,
    return
  }
  func.func @transform_0(%arg0: i32) -> (i32, i32) {
    %c0_i32 = arith.constant 0 : i32
    %c0_i32_0 = arith.constant 0 : i32
    return %arg0, %c0_i32 : i32, i32
  }
  func.func @transform_1(%arg0: i32) -> (i32, i32) {
    %c0_i32 = arith.constant 0 : i32
    %c0_i32_0 = arith.constant 0 : i32
    return %arg0, %c0_i32 : i32, i32
  }
}

</mosaic_0001>

<llo_original>
// kernel: sparsemax.1
$region0: #{sparsemax.1}
  #allocation0 [shape = 'u32[]', space=smem, size = 0x4, offset = 0x4, fixed_abs, tag = 'smem constant byte address 0x4 - core index']
  #allocation1 [shape = 'u32[144,128]{1,0:T(1,128)}', space=vmem, size = 0x12000, scoped, tag = 'internal scratch']
  %s0 = inlined_call_operand.hbm [shape: f32[128,16], index: 0, kind: input, shape index: {}]
  %s1 = inlined_call_operand.hbm [shape: f32[128,16], index: 1, kind: output, shape index: {}]
  %s2 = sld [smem:[#allocation0]]
  $region18: #{sparsemax.1} parent=0
    _
  %s4 = ssub.s32 1, %s2
  %s5 = scalar_select 0, %s4, %s2
  $region1: #{sparsemax.1} parent=0
    #allocation2 [shape = 'u8[65536]{0}', space=vmem, size = 0x10000, scoped, tag = 'input window, operand 0, single buffered']
    #allocation3 [shape = 's32[1]{0}', space=sflag, size = 0x4, scoped, tag = 'scoped memory for sparsemax.1']
    #allocation4 [shape = 's32[1]{0}', space=sflag, size = 0x4, scoped, tag = 'scoped memory for sparsemax.1']
    #allocation5 [shape = 'u8[65536]{0}', space=vmem, size = 0x10000, scoped, tag = 'output window, operand 0, single buffered']
    %6 = vsyncpa [#allocation3], 0
    %7 = vsyncpa [#allocation4], 0
    // Predicated region
    $region2: #{sparsemax.1} parent=1 // pred_check
      _
    $region3: #{sparsemax.1} parent=1 // pred_check_branch
      %9 = sbr.rel (0) target = $region5
    $region4: #{sparsemax.1} parent=1 // pred_region
      %s11 = ssub.s32 2048, 2048
      %12 = vsyncadd [#allocation3], %s11
      %s13 = sshll.u32 [#allocation2], 4
      %s14 = int_to_ptr.vmem [resolvable:$true] %s13
      %19 = dma.hbm_to_vmem [thread:$0]  %s0, 2048, %s14, [#allocation3], 128, 128, 8
    $region5: #{sparsemax.1} parent=1 // pred_fallthru
      _
    // Predicated region
    $region6: #{sparsemax.1} parent=1 // pred_check
      _
    $region7: #{sparsemax.1} parent=1 // pred_check_branch
      %21 = sbr.rel (0) target = $region9
    $region8: #{sparsemax.1} parent=1 // pred_region
      %22 = dma.done [#allocation3], 2048
    $region9: #{sparsemax.1} parent=1 // pred_fallthru
      _
    %v23 = vld [vmem:[#allocation2] sm:$0xff]
    %v24 = vld [vmem:[#allocation2 + $0x8] sm:$0xff]
    %v25 = vld [vmem:[#allocation2 + $0x10] sm:$0xff]
    %v26 = vld [vmem:[#allocation2 + $0x18] sm:$0xff]
    %v27 = vld [vmem:[#allocation2 + $0x20] sm:$0xff]
    %v28 = vld [vmem:[#allocation2 + $0x28] sm:$0xff]
    %v29 = vld [vmem:[#allocation2 + $0x30] sm:$0xff]
    %v30 = vld [vmem:[#allocation2 + $0x38] sm:$0xff]
    %v31 = vld [vmem:[#allocation2 + $0x40] sm:$0xff]
    %v32 = vld [vmem:[#allocation2 + $0x48] sm:$0xff]
    %v33 = vld [vmem:[#allocation2 + $0x50] sm:$0xff]
    %v34 = vld [vmem:[#allocation2 + $0x58] sm:$0xff]
    %v35 = vld [vmem:[#allocation2 + $0x60] sm:$0xff]
    %v36 = vld [vmem:[#allocation2 + $0x68] sm:$0xff]
    %v37 = vld [vmem:[#allocation2 + $0x70] sm:$0xff]
    %v38 = vld [vmem:[#allocation2 + $0x78] sm:$0xff]
    %39 = vxpose.xlu0.b32.start [1/16] %v23, 128
    %40 = vxpose.xlu0.b32.cont [2/16] %v24, 128
    %41 = vxpose.xlu0.b32.cont [3/16] %v25, 128
    %42 = vxpose.xlu0.b32.cont [4/16] %v26, 128
    %43 = vxpose.xlu0.b32.cont [5/16] %v27, 128
    %44 = vxpose.xlu0.b32.cont [6/16] %v28, 128
    %45 = vxpose.xlu0.b32.cont [7/16] %v29, 128
    %46 = vxpose.xlu0.b32.cont [8/16] %v30, 128
    %47 = vxpose.xlu0.b32.cont [9/16] %v31, 128
    %48 = vxpose.xlu0.b32.cont [10/16] %v32, 128
    %49 = vxpose.xlu0.b32.cont [11/16] %v33, 128
    %50 = vxpose.xlu0.b32.cont [12/16] %v34, 128
    %51 = vxpose.xlu0.b32.cont [13/16] %v35, 128
    %52 = vxpose.xlu0.b32.cont [14/16] %v36, 128
    %53 = vxpose.xlu0.b32.cont [15/16] %v37, 128
    %54 = vxpose.xlu0.b32.end [16/16] %v38, 128
    %v55 = vpop.trf.xlu0
    %v56 = vpop.trf.xlu0
    %v57 = vpop.trf.xlu0
    %v58 = vpop.trf.xlu0
    %v59 = vpop.trf.xlu0
    %v60 = vpop.trf.xlu0
    %v61 = vpop.trf.xlu0
    %v62 = vpop.trf.xlu0
    %v63 = vpop.trf.xlu0
    %v64 = vpop.trf.xlu0
    %v65 = vpop.trf.xlu0
    %v66 = vpop.trf.xlu0
    %v67 = vpop.trf.xlu0
    %v68 = vpop.trf.xlu0
    %v69 = vpop.trf.xlu0
    %v70 = vpop.trf.xlu0
    %v71 = vmax.f32 %v55, %v56
    %v72 = vrot.slane %v71, 4
    %v73 = vmax.f32 %v71, %v72
    %v74 = vrot.slane %v73, 2
    %v75 = vmax.f32 %v73, %v74
    %v76 = vrot.slane %v75, 1
    %v77 = vmax.f32 %v75, %v76
    %v78 = vsub.f32 %v55, %v77
    %v79 = vsub.f32 %v56, %v77
    %v82 = vcombine.high %v78, %v78
    %v84 = vunpack.c.l.s4 1966171168
    %v85 = vunpack.c.0.s8 %v84
    %v86 = vlaneseq
    %v87 = vshrl.u32 %v86, 7
    %v88 = vsub.s32 %v85, %v87
    %v89 = vrot.slane %v78, %v88
    %v91 = vunpack.c.l.s4 1966171168
    %v92 = vunpack.c.0.s8 %v91
    %v93 = vlaneseq
    %v94 = vshrl.u32 %v93, 7
    %v95 = vsub.s32 %v92, %v94
    %v96 = vrot.slane %v82, %v95
    %v97 = vcombine.high %v89, %v89
    %v98 = vcombine.high %v96, %v96
    %v100 = vunpack.c.l.s4 1966171168
    %v101 = vunpack.c.0.s8 %v100
    %v102 = vlaneseq
    %v103 = vshrl.u32 %v102, 7
    %v104 = vsub.s32 %v101, %v103
    %v105 = vrot.slane %v89, %v104
    %v107 = vunpack.c.l.s4 1966171168
    %v108 = vunpack.c.0.s8 %v107
    %v109 = vlaneseq
    %v110 = vshrl.u32 %v109, 7
    %v111 = vsub.s32 %v108, %v110
    %v112 = vrot.slane %v96, %v111
    %v114 = vunpack.c.l.s4 1966171168
    %v115 = vunpack.c.0.s8 %v114
    %v116 = vlaneseq
    %v117 = vshrl.u32 %v116, 7
    %v118 = vsub.s32 %v115, %v117
    %v119 = vrot.slane %v97, %v118
    %v121 = vunpack.c.l.s4 1966171168
    %v122 = vunpack.c.0.s8 %v121
    %v123 = vlaneseq
    %v124 = vshrl.u32 %v123, 7
    %v125 = vsub.s32 %v122, %v124
    %v126 = vrot.slane %v98, %v125
    %v127 = vcombine.high %v105, %v105
    %v128 = vcombine.high %v112, %v112
    %v129 = vcombine.high %v119, %v119
    %v130 = vcombine.high %v126, %v126
    %v131 = vcombine.high %v79, %v79
    %v133 = vunpack.c.l.s4 1966171168
    %v134 = vunpack.c.0.s8 %v133
    %v135 = vlaneseq
    %v136 = vshrl.u32 %v135, 7
    %v137 = vsub.s32 %v134, %v136
    %v138 = vrot.slane %v79, %v137
    %v140 = vunpack.c.l.s4 1966171168
    %v141 = vunpack.c.0.s8 %v140
    %v142 = vlaneseq
    %v143 = vshrl.u32 %v142, 7
    %v144 = vsub.s32 %v141, %v143
    %v145 = vrot.slane %v131, %v144
    %v146 = vcombine.high %v138, %v138
    %v147 = vcombine.high %v145, %v145
    %v149 = vunpack.c.l.s4 1966171168
    %v150 = vunpack.c.0.s8 %v149
    %v151 = vlaneseq
    %v152 = vshrl.u32 %v151, 7
    %v153 = vsub.s32 %v150, %v152
    %v154 = vrot.slane %v138, %v153
    %v156 = vunpack.c.l.s4 1966171168
    %v157 = vunpack.c.0.s8 %v156
    %v158 = vlaneseq
    %v159 = vshrl.u32 %v158, 7
    %v160 = vsub.s32 %v157, %v159
    %v161 = vrot.slane %v145, %v160
    %v163 = vunpack.c.l.s4 1966171168
    %v164 = vunpack.c.0.s8 %v163
    %v165 = vlaneseq
    %v166 = vshrl.u32 %v165, 7
    %v167 = vsub.s32 %v164, %v166
    %v168 = vrot.slane %v146, %v167
    %v170 = vunpack.c.l.s4 1966171168
    %v171 = vunpack.c.0.s8 %v170
    %v172 = vlaneseq
    %v173 = vshrl.u32 %v172, 7
    %v174 = vsub.s32 %v171, %v173
    %v175 = vrot.slane %v147, %v174
    %v176 = vcombine.high %v154, %v154
    %v177 = vcombine.high %v161, %v161
    %v178 = vcombine.high %v168, %v168
    %v179 = vcombine.high %v175, %v175
    %v180 = vlaneseq
    %v181 = vshrl.u32 %v180, 7
    %v182 = vsub.s32 0, %v181
    %v183 = vrot.slane %v105, %v182
    %v184 = vlaneseq
    %v185 = vshrl.u32 %v184, 7
    %v186 = vsub.s32 0, %v185
    %v187 = vrot.slane %v119, %v186
    %v188 = vlaneseq
    %v189 = vshrl.u32 %v188, 7
    %v190 = vsub.s32 0, %v189
    %v191 = vrot.slane %v127, %v190
    %v192 = vlaneseq
    %v193 = vshrl.u32 %v192, 7
    %v194 = vsub.s32 0, %v193
    %v195 = vrot.slane %v129, %v194
    %v196 = vlaneseq
    %v197 = vshrl.u32 %v196, 7
    %v198 = vsub.s32 0, %v197
    %v199 = vrot.slane %v112, %v198
    %v200 = vlaneseq
    %v201 = vshrl.u32 %v200, 7
    %v202 = vsub.s32 0, %v201
    %v203 = vrot.slane %v126, %v202
    %v204 = vlaneseq
    %v205 = vshrl.u32 %v204, 7
    %v206 = vsub.s32 0, %v205
    %v207 = vrot.slane %v128, %v206
    %v208 = vlaneseq
    %v209 = vshrl.u32 %v208, 7
    %v210 = vsub.s32 0, %v209
    %v211 = vrot.slane %v130, %v210
    %v212 = vlaneseq
    %v213 = vshrl.u32 %v212, 7
    %v214 = vsub.s32 0, %v213
    %v215 = vrot.slane %v154, %v214
    %v216 = vlaneseq
    %v217 = vshrl.u32 %v216, 7
    %v218 = vsub.s32 0, %v217
    %v219 = vrot.slane %v168, %v218
    %v220 = vlaneseq
    %v221 = vshrl.u32 %v220, 7
    %v222 = vsub.s32 0, %v221
    %v223 = vrot.slane %v176, %v222
    %v224 = vlaneseq
    %v225 = vshrl.u32 %v224, 7
    %v226 = vsub.s32 0, %v225
    %v227 = vrot.slane %v178, %v226
    %v228 = vlaneseq
    %v229 = vshrl.u32 %v228, 7
    %v230 = vsub.s32 0, %v229
    %v231 = vrot.slane %v161, %v230
    %v232 = vlaneseq
    %v233 = vshrl.u32 %v232, 7
    %v234 = vsub.s32 0, %v233
    %v235 = vrot.slane %v175, %v234
    %v236 = vlaneseq
    %v237 = vshrl.u32 %v236, 7
    %v238 = vsub.s32 0, %v237
    %v239 = vrot.slane %v177, %v238
    %v240 = vlaneseq
    %v241 = vshrl.u32 %v240, 7
    %v242 = vsub.s32 0, %v241
    %v243 = vrot.slane %v179, %v242
    %vm260 = vcmp.ge.f32.partialorder %v183, %v78
    %vm261 = vcmp.ge.f32.partialorder %v183, %v79
    %vm262 = vcmp.ge.f32.partialorder %v187, %v78
    %vm263 = vcmp.ge.f32.partialorder %v187, %v79
    %vm264 = vcmp.ge.f32.partialorder %v191, %v78
    %vm265 = vcmp.ge.f32.partialorder %v191, %v79
    %vm266 = vcmp.ge.f32.partialorder %v195, %v78
    %vm267 = vcmp.ge.f32.partialorder %v195, %v79
    %vm268 = vcmp.ge.f32.partialorder %v199, %v78
    %vm269 = vcmp.ge.f32.partialorder %v199, %v79
    %vm270 = vcmp.ge.f32.partialorder %v203, %v78
    %vm271 = vcmp.ge.f32.partialorder %v203, %v79
    %vm272 = vcmp.ge.f32.partialorder %v207, %v78
    %vm273 = vcmp.ge.f32.partialorder %v207, %v79
    %vm274 = vcmp.ge.f32.partialorder %v211, %v78
    %vm275 = vcmp.ge.f32.partialorder %v211, %v79
    %vm276 = vcmp.ge.f32.partialorder %v215, %v78
    %vm277 = vcmp.ge.f32.partialorder %v215, %v79
    %vm278 = vcmp.ge.f32.partialorder %v219, %v78
    %vm279 = vcmp.ge.f32.partialorder %v219, %v79
    %vm280 = vcmp.ge.f32.partialorder %v223, %v78
    %vm281 = vcmp.ge.f32.partialorder %v223, %v79
    %vm282 = vcmp.ge.f32.partialorder %v227, %v78
    %vm283 = vcmp.ge.f32.partialorder %v227, %v79
    %vm284 = vcmp.ge.f32.partialorder %v231, %v78
    %vm285 = vcmp.ge.f32.partialorder %v231, %v79
    %vm286 = vcmp.ge.f32.partialorder %v235, %v78
    %vm287 = vcmp.ge.f32.partialorder %v235, %v79
    %vm288 = vcmp.ge.f32.partialorder %v239, %v78
    %vm289 = vcmp.ge.f32.partialorder %v239, %v79
    %vm290 = vcmp.ge.f32.partialorder %v243, %v78
    %vm291 = vcmp.ge.f32.partialorder %v243, %v79
    %v292 = vsel %vm260, 1, 0
    %v293 = vsel %vm261, 1, 0
    %v294 = vsel %vm262, 1, 0
    %v295 = vsel %vm263, 1, 0
    %v296 = vsel %vm264, 1, 0
    %v297 = vsel %vm265, 1, 0
    %v298 = vsel %vm266, 1, 0
    %v299 = vsel %vm267, 1, 0
    %v300 = vsel %vm268, 1, 0
    %v301 = vsel %vm269, 1, 0
    %v302 = vsel %vm270, 1, 0
    %v303 = vsel %vm271, 1, 0
    %v304 = vsel %vm272, 1, 0
    %v305 = vsel %vm273, 1, 0
    %v306 = vsel %vm274, 1, 0
    %v307 = vsel %vm275, 1, 0
    %v308 = vsel %vm276, 1, 0
    %v309 = vsel %vm277, 1, 0
    %v310 = vsel %vm278, 1, 0
    %v311 = vsel %vm279, 1, 0
    %v312 = vsel %vm280, 1, 0
    %v313 = vsel %vm281, 1, 0
    %v314 = vsel %vm282, 1, 0
    %v315 = vsel %vm283, 1, 0
    %v316 = vsel %vm284, 1, 0
    %v317 = vsel %vm285, 1, 0
    %v318 = vsel %vm286, 1, 0
    %v319 = vsel %vm287, 1, 0
    %v320 = vsel %vm288, 1, 0
    %v321 = vsel %vm289, 1, 0
    %v322 = vsel %vm290, 1, 0
    %v323 = vsel %vm291, 1, 0
    %v324 = vcvt.s32.f32 %v292
    %v325 = vcvt.s32.f32 %v293
    %v326 = vcvt.s32.f32 %v294
    %v327 = vcvt.s32.f32 %v295
    %v328 = vcvt.s32.f32 %v296
    %v329 = vcvt.s32.f32 %v297
    %v330 = vcvt.s32.f32 %v298
    %v331 = vcvt.s32.f32 %v299
    %v332 = vcvt.s32.f32 %v300
    %v333 = vcvt.s32.f32 %v301
    %v334 = vcvt.s32.f32 %v302
    %v335 = vcvt.s32.f32 %v303
    %v336 = vcvt.s32.f32 %v304
    %v337 = vcvt.s32.f32 %v305
    %v338 = vcvt.s32.f32 %v306
    %v339 = vcvt.s32.f32 %v307
    %v340 = vcvt.s32.f32 %v308
    %v341 = vcvt.s32.f32 %v309
    %v342 = vcvt.s32.f32 %v310
    %v343 = vcvt.s32.f32 %v311
    %v344 = vcvt.s32.f32 %v312
    %v345 = vcvt.s32.f32 %v313
    %v346 = vcvt.s32.f32 %v314
    %v347 = vcvt.s32.f32 %v315
    %v348 = vcvt.s32.f32 %v316
    %v349 = vcvt.s32.f32 %v317
    %v350 = vcvt.s32.f32 %v318
    %v351 = vcvt.s32.f32 %v319
    %v352 = vcvt.s32.f32 %v320
    %v353 = vcvt.s32.f32 %v321
    %v354 = vcvt.s32.f32 %v322
    %v355 = vcvt.s32.f32 %v323
    %v356 = vadd.f32 %v324, %v326
    %v357 = vadd.f32 %v356, %v328
    %v358 = vadd.f32 %v357, %v330
    %v359 = vadd.f32 %v358, %v332
    %v360 = vadd.f32 %v359, %v334
    %v361 = vadd.f32 %v360, %v336
    %v362 = vadd.f32 %v361, %v338
    %v363 = vadd.f32 %v362, %v340
    %v364 = vadd.f32 %v363, %v342
    %v365 = vadd.f32 %v364, %v344
    %v366 = vadd.f32 %v365, %v346
    %v367 = vadd.f32 %v366, %v348
    %v368 = vadd.f32 %v367, %v350
    %v369 = vadd.f32 %v368, %v352
    %v370 = vadd.f32 %v369, %v354
    %v371 = vadd.f32 %v325, %v327
    %v372 = vadd.f32 %v371, %v329
    %v373 = vadd.f32 %v372, %v331
    %v374 = vadd.f32 %v373, %v333
    %v375 = vadd.f32 %v374, %v335
    %v376 = vadd.f32 %v375, %v337
    %v377 = vadd.f32 %v376, %v339
    %v378 = vadd.f32 %v377, %v341
    %v379 = vadd.f32 %v378, %v343
    %v380 = vadd.f32 %v379, %v345
    %v381 = vadd.f32 %v380, %v347
    %v382 = vadd.f32 %v381, %v349
    %v383 = vadd.f32 %v382, %v351
    %v384 = vadd.f32 %v383, %v353
    %v385 = vadd.f32 %v384, %v355
    %v386 = vadd.f32 %v370, 0.0
    %v387 = vadd.f32 %v385, 0.0
    %v388 = vmul.f32 %v324, %v183
    %v389 = vmul.f32 %v325, %v183
    %v390 = vmul.f32 %v326, %v187
    %v391 = vmul.f32 %v327, %v187
    %v392 = vmul.f32 %v328, %v191
    %v393 = vmul.f32 %v329, %v191
    %v394 = vmul.f32 %v330, %v195
    %v395 = vmul.f32 %v331, %v195
    %v396 = vmul.f32 %v332, %v199
    %v397 = vmul.f32 %v333, %v199
    %v398 = vmul.f32 %v334, %v203
    %v399 = vmul.f32 %v335, %v203
    %v400 = vmul.f32 %v336, %v207
    %v401 = vmul.f32 %v337, %v207
    %v402 = vmul.f32 %v338, %v211
    %v403 = vmul.f32 %v339, %v211
    %v404 = vmul.f32 %v340, %v215
    %v405 = vmul.f32 %v341, %v215
    %v406 = vmul.f32 %v342, %v219
    %v407 = vmul.f32 %v343, %v219
    %v408 = vmul.f32 %v344, %v223
    %v409 = vmul.f32 %v345, %v223
    %v410 = vmul.f32 %v346, %v227
    %v411 = vmul.f32 %v347, %v227
    %v412 = vmul.f32 %v348, %v231
    %v413 = vmul.f32 %v349, %v231
    %v414 = vmul.f32 %v350, %v235
    %v415 = vmul.f32 %v351, %v235
    %v416 = vmul.f32 %v352, %v239
    %v417 = vmul.f32 %v353, %v239
    %v418 = vmul.f32 %v354, %v243
    %v419 = vmul.f32 %v355, %v243
    %v420 = vadd.f32 %v388, %v390
    %v421 = vadd.f32 %v420, %v392
    %v422 = vadd.f32 %v421, %v394
    %v423 = vadd.f32 %v422, %v396
    %v424 = vadd.f32 %v423, %v398
    %v425 = vadd.f32 %v424, %v400
    %v426 = vadd.f32 %v425, %v402
    %v427 = vadd.f32 %v426, %v404
    %v428 = vadd.f32 %v427, %v406
    %v429 = vadd.f32 %v428, %v408
    %v430 = vadd.f32 %v429, %v410
    %v431 = vadd.f32 %v430, %v412
    %v432 = vadd.f32 %v431, %v414
    %v433 = vadd.f32 %v432, %v416
    %v434 = vadd.f32 %v433, %v418
    %v435 = vadd.f32 %v389, %v391
    %v436 = vadd.f32 %v435, %v393
    %v437 = vadd.f32 %v436, %v395
    %v438 = vadd.f32 %v437, %v397
    %v439 = vadd.f32 %v438, %v399
    %v440 = vadd.f32 %v439, %v401
    %v441 = vadd.f32 %v440, %v403
    %v442 = vadd.f32 %v441, %v405
    %v443 = vadd.f32 %v442, %v407
    %v444 = vadd.f32 %v443, %v409
    %v445 = vadd.f32 %v444, %v411
    %v446 = vadd.f32 %v445, %v413
    %v447 = vadd.f32 %v446, %v415
    %v448 = vadd.f32 %v447, %v417
    %v449 = vadd.f32 %v448, %v419
    %v450 = vadd.f32 %v434, 0.0
    %v451 = vadd.f32 %v449, 0.0
    %v452 = vmul.f32 %v386, %v78
    %v453 = vmul.f32 %v387, %v79
    %v454 = vadd.f32 %v452, 1.0
    %v455 = vadd.f32 %v453, 1.0
    %vm456 = vcmp.gt.f32.partialorder %v454, %v450
    %vm457 = vcmp.gt.f32.partialorder %v455, %v451
    %v458 = vsel %vm456, 1, 0
    %v459 = vsel %vm457, 1, 0
    %v460 = vcvt.s32.f32 %v458
    %v461 = vcvt.s32.f32 %v459
    %v462 = vmul.f32 %v460, %v386
    %v463 = vmul.f32 %v461, %v387
    %v464 = vmax.f32 %v462, %v463
    %v465 = vrot.slane %v464, 4
    %v466 = vmax.f32 %v464, %v465
    %v467 = vrot.slane %v466, 2
    %v468 = vmax.f32 %v466, %v467
    %v469 = vrot.slane %v468, 1
    %v470 = vmax.f32 %v468, %v469
    %v471 = vmul.f32 %v460, %v78
    %v472 = vmul.f32 %v461, %v79
    %v473 = vadd.f32 %v471, %v472
    %v474 = vrot.slane %v473, 4
    %v475 = vadd.f32 %v473, %v474
    %v476 = vrot.slane %v475, 2
    %v477 = vadd.f32 %v475, %v476
    %v478 = vrot.slane %v477, 1
    %v479 = vadd.f32 %v477, %v478
    %v480 = vsub.f32 %v479, 1.0
    %v481 = vrcp.pop %v470
    %v482 = vmul.f32 %v480, %v481
    %v483 = vsub.f32 %v78, %v482
    %v484 = vsub.f32 %v79, %v482
    %v485 = vmax.f32 %v483, 0.0
    %v486 = vmax.f32 %v484, 0.0
    %487 = vxpose.xlu0.b32.start [1/16] %v485, 128
    %488 = vxpose.xlu0.b32.cont [2/16] %v486, 128
    %489 = vxpose.xlu0.b32.cont [3/16] 0.0, 128
    %490 = vxpose.xlu0.b32.cont [4/16] 0.0, 128
    %491 = vxpose.xlu0.b32.cont [5/16] 0.0, 128
    %492 = vxpose.xlu0.b32.cont [6/16] 0.0, 128
    %493 = vxpose.xlu0.b32.cont [7/16] 0.0, 128
    %494 = vxpose.xlu0.b32.cont [8/16] 0.0, 128
    %495 = vxpose.xlu0.b32.cont [9/16] 0.0, 128
    %496 = vxpose.xlu0.b32.cont [10/16] 0.0, 128
    %497 = vxpose.xlu0.b32.cont [11/16] 0.0, 128
    %498 = vxpose.xlu0.b32.cont [12/16] 0.0, 128
    %499 = vxpose.xlu0.b32.cont [13/16] 0.0, 128
    %500 = vxpose.xlu0.b32.cont [14/16] 0.0, 128
    %501 = vxpose.xlu0.b32.cont [15/16] 0.0, 128
    %502 = vxpose.xlu0.b32.end [16/16] 0.0, 128
    %v503 = vpop.trf.xlu0
    %v504 = vpop.trf.xlu0
    %v505 = vpop.trf.xlu0
    %v506 = vpop.trf.xlu0
    %v507 = vpop.trf.xlu0
    %v508 = vpop.trf.xlu0
    %v509 = vpop.trf.xlu0
    %v510 = vpop.trf.xlu0
    %v511 = vpop.trf.xlu0
    %v512 = vpop.trf.xlu0
    %v513 = vpop.trf.xlu0
    %v514 = vpop.trf.xlu0
    %v515 = vpop.trf.xlu0
    %v516 = vpop.trf.xlu0
    %v517 = vpop.trf.xlu0
    %v518 = vpop.trf.xlu0
    %vm519 = vcmask 130048
    %520 = vst.msk [vmem:[#allocation5] sm:$0xff] %vm519, %v503
    %521 = vst.msk [vmem:[#allocation5 + $0x8] sm:$0xff] %vm519, %v504
    %522 = vst.msk [vmem:[#allocation5 + $0x10] sm:$0xff] %vm519, %v505
    %523 = vst.msk [vmem:[#allocation5 + $0x18] sm:$0xff] %vm519, %v506
    %524 = vst.msk [vmem:[#allocation5 + $0x20] sm:$0xff] %vm519, %v507
    %525 = vst.msk [vmem:[#allocation5 + $0x28] sm:$0xff] %vm519, %v508
    %526 = vst.msk [vmem:[#allocation5 + $0x30] sm:$0xff] %vm519, %v509
    %527 = vst.msk [vmem:[#allocation5 + $0x38] sm:$0xff] %vm519, %v510
    %528 = vst.msk [vmem:[#allocation5 + $0x40] sm:$0xff] %vm519, %v511
    %529 = vst.msk [vmem:[#allocation5 + $0x48] sm:$0xff] %vm519, %v512
    %530 = vst.msk [vmem:[#allocation5 + $0x50] sm:$0xff] %vm519, %v513
    %531 = vst.msk [vmem:[#allocation5 + $0x58] sm:$0xff] %vm519, %v514
    %532 = vst.msk [vmem:[#allocation5 + $0x60] sm:$0xff] %vm519, %v515
    %533 = vst.msk [vmem:[#allocation5 + $0x68] sm:$0xff] %vm519, %v516
    %534 = vst.msk [vmem:[#allocation5 + $0x70] sm:$0xff] %vm519, %v517
    %535 = vst.msk [vmem:[#allocation5 + $0x78] sm:$0xff] %vm519, %v518
    // Predicated region
    $region10: #{sparsemax.1} parent=1 // pred_check
      _
    $region11: #{sparsemax.1} parent=1 // pred_check_branch
      %537 = sbr.rel (0) target = $region13
    $region12: #{sparsemax.1} parent=1 // pred_region
      %s539 = ssub.s32 2048, 2048
      %540 = vsyncadd [#allocation4], %s539
      %s541 = sshll.u32 [#allocation5], 4
      %s542 = int_to_ptr.vmem [resolvable:$true] %s541
      %547 = dma.vmem_to_hbm [thread:$0]  %s542, 2048, %s1, [#allocation4], 128, 128, 8
    $region13: #{sparsemax.1} parent=1 // pred_fallthru
      _
    // Predicated region
    $region14: #{sparsemax.1} parent=1 // pred_check
      _
    $region15: #{sparsemax.1} parent=1 // pred_check_branch
      %549 = sbr.rel (0) target = $region17
    $region16: #{sparsemax.1} parent=1 // pred_region
      %550 = dma.done [#allocation4], 2048
    $region17: #{sparsemax.1} parent=1 // pred_fallthru
      _
    %551 = vsyncpa [#allocation3], 1
    %552 = vsyncpa [#allocation4], 1

</llo_original>
